<compile_context>
chip_gen: v7x
topology: tpu7x:2x2x1
jax: 0.10.0
libtpu: 0.0.40
codegen_flags: <defaults>
</compile_context>

<pallas_src>
import jax
import jax.numpy as jnp
from jax.experimental import pallas as pl
from jax.experimental.pallas import tpu as pltpu

_LEAKY_SLOPE = 0.2
_H1, _H2 = 256, 128
_LANE = 128
_SUBLANE = 8


def _round_up(x, m):
    return (x + m - 1) // m * m


def _discriminator_kernel(xT_ref, w1t_ref, b1_ref, w2t_ref, b2_ref, w3_ref, b3_ref, o_ref):
    # Layer 1: (H1, Kp) @ (Kp, tile_b) -> (H1, tile_b).  Batch on lanes; no transpose.
    h1 = jnp.dot(w1t_ref[...], xT_ref[...],
                 preferred_element_type=jnp.float32) + b1_ref[...]
    # LeakyReLU(0.2) in f32, then explicit downcast so the (H1, tile_b)
    # intermediate is stored/loaded at matmul precision (halves bytes on bf16).
    h1 = jnp.where(h1 > 0, h1, _LEAKY_SLOPE * h1).astype(w2t_ref.dtype)

    # Layer 2: (H2, H1) @ (H1, tile_b) -> (H2, tile_b).
    h2 = jnp.dot(w2t_ref[...], h1,
                 preferred_element_type=jnp.float32) + b2_ref[...]
    h2 = jnp.where(h2 > 0, h2, _LEAKY_SLOPE * h2).astype(w3_ref.dtype)

    # Layer 3: w3 replicated to 8 sublanes (MXU-friendly) -> (8, tile_b); all 8
    # rows are identical, keep only row 0 before bias/sigmoid so the EUP work and
    # the output store are 1 row, lane-dense across the batch.
    logits = jnp.dot(w3_ref[...], h2, preferred_element_type=jnp.float32)
    z = logits[0:1, :] + b3_ref[...]

    # Sigmoid: exp + approximate reciprocal both live on the EUP slot.
    o_ref[...] = pl.reciprocal(1.0 + jnp.exp(-z), approx=True)


def discriminator_forward(x, labels, params, *, block_rows=2048, matmul_dtype=jnp.bfloat16):
    """x: (B, num_features) f32, labels: (B, num_classes) f32 -> (B, 1) f32."""
    w1, b1, w2, b2, w3, b3 = params
    B = x.shape[0]
    K = x.shape[1] + labels.shape[1]
    assert w1.shape == (K, _H1)

    # Batch tile (lane axis): multiples of 128.  For moderate B, split into at
    # least two grid steps so v7x can shard the parallel axis over both TCs.
    block_rows = max(_LANE, _round_up(block_rows, _LANE))
    if B <= _LANE:
        tile_b = _LANE
    else:
        tile_b = min(block_rows, _round_up(-(-B // 2), _LANE))
    Bp = _round_up(B, tile_b)

    # K sits on the sublane/contraction axis now: pad only to packing granularity.
    k_align = 16 if jnp.dtype(matmul_dtype).itemsize < 4 else _SUBLANE
    Kp = _round_up(K, k_align)

    # Concat + transpose + pad + cast once in the wrapper (single fused XLA op,
    # ~Kp*2 bytes/row instead of 128*2); kernel only sees lane-aligned operands.
    inpT = jnp.concatenate([x, labels], axis=1).T            # (K, B)
    inpT = jnp.pad(inpT, ((0, Kp - K), (0, Bp - B))).astype(matmul_dtype)

    w1t = jnp.pad(w1.T, ((0, 0), (0, Kp - K))).astype(matmul_dtype)   # (H1, Kp)
    w2t = w2.T.astype(matmul_dtype)                                    # (H2, H1)
    b1c = b1.reshape(_H1, 1).astype(jnp.float32)
    b2c = b2.reshape(_H2, 1).astype(jnp.float32)
    w3rep = jnp.broadcast_to(w3.reshape(1, _H2), (_SUBLANE, _H2)).astype(matmul_dtype)
    b3c = b3.reshape(1, 1).astype(jnp.float32)

    const = lambda i: (0, 0)   # weights/biases: same block every step -> VMEM resident
    out = pl.pallas_call(
        _discriminator_kernel,
        out_shape=jax.ShapeDtypeStruct((1, Bp), jnp.float32),
        grid_spec=pltpu.PrefetchScalarGridSpec(
            num_scalar_prefetch=0,
            grid=(Bp // tile_b,),
            in_specs=[
                pl.BlockSpec((Kp, tile_b), lambda i: (0, i)),   # x^T tile (pipelined)
                pl.BlockSpec((_H1, Kp), const),                 # W1^T
                pl.BlockSpec((_H1, 1), const),                  # b1 (column)
                pl.BlockSpec((_H2, _H1), const),                # W2^T
                pl.BlockSpec((_H2, 1), const),                  # b2 (column)
                pl.BlockSpec((_SUBLANE, _H2), const),           # W3 (replicated rows)
                pl.BlockSpec((1, 1), const),                    # b3
            ],
            out_specs=pl.BlockSpec((1, tile_b), lambda i: (0, i)),
        ),
        compiler_params=pltpu.CompilerParams(
            dimension_semantics=("parallel",),
        ),
    )(inpT, w1t, b1c, w2t, b2c, w3rep, b3c)

    # (1, Bp) lane-dense row back to (B, 1).
    return out[0, :B][:, None]


def init_params(key, num_features, num_classes):
    """PyTorch nn.Linear-style init (U[-1/sqrt(fan_in), 1/sqrt(fan_in)]).
    Weights stored as (in_dim, out_dim)."""
    dims = [(num_features + num_classes, _H1), (_H1, _H2), (_H2, 1)]
    params = []
    for fan_in, fan_out in dims:
        key, kw, kb = jax.random.split(key, 3)
        bound = 1.0 / jnp.sqrt(jnp.float32(fan_in))
        w = jax.random.uniform(kw, (fan_in, fan_out), jnp.float32, -bound, bound)
        b = jax.random.uniform(kb, (1, fan_out), jnp.float32, -bound, bound)
        params.extend([w, b])
    return tuple(params)


def reference_forward(x, labels, params):
    w1, b1, w2, b2, w3, b3 = params
    inp = jnp.concatenate([x, labels], axis=1)
    h1 = inp @ w1 + b1
    h1 = jnp.where(h1 > 0, h1, _LEAKY_SLOPE * h1)
    h2 = h1 @ w2 + b2
    h2 = jnp.where(h2 > 0, h2, _LEAKY_SLOPE * h2)
    return jax.nn.sigmoid(h2 @ w3 + b3)


if __name__ == "__main__":
    num_features, num_classes, batch = 32, 4, 8

    key = jax.random.PRNGKey(0)
    key, kx, kl = jax.random.split(key, 3)
    x = jax.random.normal(kx, (batch, num_features), jnp.float32)
    label_idx = jax.random.randint(kl, (batch,), 0, num_classes)
    labels = jax.nn.one_hot(label_idx, num_classes, dtype=jnp.float32)

    params = init_params(jax.random.PRNGKey(42), num_features, num_classes)
    ref = reference_forward(x, labels, params)

    # f32 matmul path (tight check; approx reciprocal only source of error).
    out_f32 = jax.block_until_ready(
        discriminator_forward(x, labels, params, matmul_dtype=jnp.float32))
    assert out_f32.shape == (batch, 1)
    assert jnp.allclose(out_f32, ref, atol=2e-3, rtol=0), "f32 path mismatch vs reference"

    # bf16-MXU path (default; looser tolerance for bf16 rounding).
    out_bf16 = jax.block_until_ready(discriminator_forward(x, labels, params))
    assert out_bf16.shape == (batch, 1)
    assert jnp.allclose(out_bf16, ref, atol=5e-2, rtol=0), "bf16 path mismatch vs reference"

    print("KERNEL_OK")
</pallas_src>

<mosaic_0001>
module attributes {stable_mosaic.version = 11 : i64} {
  func.func @_discriminator_kernel(%arg0: i32, %arg1: memref<40x128xf32, #tpu.memory_space<vmem>>, %arg2: memref<256x40xf32, #tpu.memory_space<vmem>>, %arg3: memref<256x1xf32, #tpu.memory_space<vmem>>, %arg4: memref<128x256xf32, #tpu.memory_space<vmem>>, %arg5: memref<128x1xf32, #tpu.memory_space<vmem>>, %arg6: memref<8x128xf32, #tpu.memory_space<vmem>>, %arg7: memref<1x1xf32, #tpu.memory_space<vmem>>, %arg8: memref<1x128xf32, #tpu.memory_space<vmem>>) attributes {dimension_semantics = [#tpu.dimension_semantics<parallel>], iteration_bounds = array<i64: 1>, scalar_prefetch = 0 : i64, scratch_operands = 0 : i64, tpu.core_type = #tpu.core_type<tc>, window_params = [{transform_indices = @transform_0, window_bounds = array<i64: 40, 128>}, {pipeline_mode = #tpu.pipeline_mode<synchronous>, transform_indices = @transform_1, window_bounds = array<i64: 256, 40>}, {pipeline_mode = #tpu.pipeline_mode<synchronous>, transform_indices = @transform_2, window_bounds = array<i64: 256, 1>}, {pipeline_mode = #tpu.pipeline_mode<synchronous>, transform_indices = @transform_3, window_bounds = array<i64: 128, 256>}, {pipeline_mode = #tpu.pipeline_mode<synchronous>, transform_indices = @transform_4, window_bounds = array<i64: 128, 1>}, {pipeline_mode = #tpu.pipeline_mode<synchronous>, transform_indices = @transform_5, window_bounds = array<i64: 8, 128>}, {pipeline_mode = #tpu.pipeline_mode<synchronous>, transform_indices = @transform_6, window_bounds = array<i64: 1, 1>}, {transform_indices = @transform_7, window_bounds = array<i64: 1, 128>}]} {
    %c0 = arith.constant 0 : index
    %c0_0 = arith.constant 0 : index
    %0 = vector.load %arg2[%c0, %c0_0] : memref<256x40xf32, #tpu.memory_space<vmem>>, vector<256x40xf32>
    %c0_1 = arith.constant 0 : index
    %c0_2 = arith.constant 0 : index
    %1 = vector.load %arg1[%c0_1, %c0_2] : memref<40x128xf32, #tpu.memory_space<vmem>>, vector<40x128xf32>
    %cst = arith.constant dense<0.000000e+00> : vector<256x128xf32>
    %2 = tpu.matmul %0, %1, %cst {dimension_numbers = #tpu.dot_dimension_numbers<[1], [0], [0], [1], [0, 0, 1, 1], [], []>} : vector<256x40xf32>, vector<40x128xf32>, vector<256x128xf32> -> vector<256x128xf32>
    %c0_3 = arith.constant 0 : index
    %c0_4 = arith.constant 0 : index
    %3 = vector.load %arg3[%c0_3, %c0_4] : memref<256x1xf32, #tpu.memory_space<vmem>>, vector<256x1xf32>
    %4 = vector.broadcast %3 : vector<256x1xf32> to vector<256x128xf32>
    %5 = arith.addf %2, %4 : vector<256x128xf32>
    %cst_5 = arith.constant 0.000000e+00 : f32
    %6 = vector.broadcast %cst_5 : f32 to vector<256x128xf32>
    %7 = arith.cmpf ogt, %5, %6 : vector<256x128xf32>
    %cst_6 = arith.constant 2.000000e-01 : f32
    %8 = vector.broadcast %cst_6 : f32 to vector<256x128xf32>
    %9 = arith.mulf %8, %5 : vector<256x128xf32>
    %10 = arith.select %7, %5, %9 : vector<256x128xi1>, vector<256x128xf32>
    %c0_7 = arith.constant 0 : index
    %c0_8 = arith.constant 0 : index
    %11 = vector.load %arg4[%c0_7, %c0_8] : memref<128x256xf32, #tpu.memory_space<vmem>>, vector<128x256xf32>
    %cst_9 = arith.constant dense<0.000000e+00> : vector<128x128xf32>
    %12 = tpu.matmul %11, %10, %cst_9 {dimension_numbers = #tpu.dot_dimension_numbers<[1], [0], [0], [1], [0, 0, 1, 1], [], []>} : vector<128x256xf32>, vector<256x128xf32>, vector<128x128xf32> -> vector<128x128xf32>
    %c0_10 = arith.constant 0 : index
    %c0_11 = arith.constant 0 : index
    %13 = vector.load %arg5[%c0_10, %c0_11] : memref<128x1xf32, #tpu.memory_space<vmem>>, vector<128x1xf32>
    %14 = vector.broadcast %13 : vector<128x1xf32> to vector<128x128xf32>
    %15 = arith.addf %12, %14 : vector<128x128xf32>
    %cst_12 = arith.constant 0.000000e+00 : f32
    %16 = vector.broadcast %cst_12 : f32 to vector<128x128xf32>
    %17 = arith.cmpf ogt, %15, %16 : vector<128x128xf32>
    %cst_13 = arith.constant 2.000000e-01 : f32
    %18 = vector.broadcast %cst_13 : f32 to vector<128x128xf32>
    %19 = arith.mulf %18, %15 : vector<128x128xf32>
    %20 = arith.select %17, %15, %19 : vector<128x128xi1>, vector<128x128xf32>
    %c0_14 = arith.constant 0 : index
    %c0_15 = arith.constant 0 : index
    %21 = vector.load %arg6[%c0_14, %c0_15] : memref<8x128xf32, #tpu.memory_space<vmem>>, vector<8x128xf32>
    %cst_16 = arith.constant dense<0.000000e+00> : vector<8x128xf32>
    %22 = tpu.matmul %21, %20, %cst_16 {dimension_numbers = #tpu.dot_dimension_numbers<[1], [0], [0], [1], [0, 0, 1, 1], [], []>} : vector<8x128xf32>, vector<128x128xf32>, vector<8x128xf32> -> vector<8x128xf32>
    %23 = vector.extract_strided_slice %22 {offsets = [0, 0], sizes = [1, 128], strides = [1, 1]} : vector<8x128xf32> to vector<1x128xf32>
    %c0_17 = arith.constant 0 : index
    %c0_18 = arith.constant 0 : index
    %24 = vector.load %arg7[%c0_17, %c0_18] : memref<1x1xf32, #tpu.memory_space<vmem>>, vector<1x1xf32>
    %25 = vector.broadcast %24 : vector<1x1xf32> to vector<1x128xf32>
    %26 = arith.addf %23, %25 : vector<1x128xf32>
    %cst_19 = arith.constant 0.000000e+00 : f32
    %27 = vector.broadcast %cst_19 : f32 to vector<1x128xf32>
    %28 = arith.subf %27, %26 : vector<1x128xf32>
    %29 = math.exp %28 : vector<1x128xf32>
    %cst_20 = arith.constant 1.000000e+00 : f32
    %30 = vector.broadcast %cst_20 : f32 to vector<1x128xf32>
    %31 = arith.addf %30, %29 : vector<1x128xf32>
    %32 = tpu.reciprocal %31 {approx = true} : vector<1x128xf32> -> vector<1x128xf32>
    %c0_21 = arith.constant 0 : index
    %c0_22 = arith.constant 0 : index
    %33 = vector.load %arg8[%c0_21, %c0_22] : memref<1x128xf32, #tpu.memory_space<vmem>>, vector<1x128xf32>
    tpu.vector_store %arg8[%c0_21, %c0_22], %32 {strides = array<i32>} : memref<1x128xf32, #tpu.memory_space<vmem>>, vector<1x128xf32>,
    return
  }
  func.func @transform_0(%arg0: i32) -> (i32, i32) {
    %c0_i32 = arith.constant 0 : i32
    %c0_i32_0 = arith.constant 0 : i32
    return %c0_i32, %arg0 : i32, i32
  }
  func.func @transform_1(%arg0: i32) -> (i32, i32) {
    %c0_i32 = arith.constant 0 : i32
    %c0_i32_0 = arith.constant 0 : i32
    %c0_i32_1 = arith.constant 0 : i32
    return %c0_i32, %c0_i32_0 : i32, i32
  }
  func.func @transform_2(%arg0: i32) -> (i32, i32) {
    %c0_i32 = arith.constant 0 : i32
    %c0_i32_0 = arith.constant 0 : i32
    %c0_i32_1 = arith.constant 0 : i32
    return %c0_i32, %c0_i32_0 : i32, i32
  }
  func.func @transform_3(%arg0: i32) -> (i32, i32) {
    %c0_i32 = arith.constant 0 : i32
    %c0_i32_0 = arith.constant 0 : i32
    %c0_i32_1 = arith.constant 0 : i32
    return %c0_i32, %c0_i32_0 : i32, i32
  }
  func.func @transform_4(%arg0: i32) -> (i32, i32) {
    %c0_i32 = arith.constant 0 : i32
    %c0_i32_0 = arith.constant 0 : i32
    %c0_i32_1 = arith.constant 0 : i32
    return %c0_i32, %c0_i32_0 : i32, i32
  }
  func.func @transform_5(%arg0: i32) -> (i32, i32) {
    %c0_i32 = arith.constant 0 : i32
    %c0_i32_0 = arith.constant 0 : i32
    %c0_i32_1 = arith.constant 0 : i32
    return %c0_i32, %c0_i32_0 : i32, i32
  }
  func.func @transform_6(%arg0: i32) -> (i32, i32) {
    %c0_i32 = arith.constant 0 : i32
    %c0_i32_0 = arith.constant 0 : i32
    %c0_i32_1 = arith.constant 0 : i32
    return %c0_i32, %c0_i32_0 : i32, i32
  }
  func.func @transform_7(%arg0: i32) -> (i32, i32) {
    %c0_i32 = arith.constant 0 : i32
    %c0_i32_0 = arith.constant 0 : i32
    return %c0_i32, %arg0 : i32, i32
  }
}

</mosaic_0001>

<llo_original>
// kernel: tpu_custom_call.1
$region0: #{tpu_custom_call.1}
  #allocation0 [shape = 'u32[]', space=smem, size = 0x4, offset = 0x4, fixed_abs, tag = 'smem constant byte address 0x4 - core index']
  #allocation1 [shape = 'u32[144,128]{1,0:T(1,128)}', space=vmem, size = 0x12000, scoped, tag = 'internal scratch']
  #allocation2 [shape = 'f32[1,1]{1,0:T(1,128)S(1)}', space=vmem, size = 0x200, scoped, tag = 'scoped memory for tpu_custom_call.1']
  %s0 = inlined_call_operand.vmem [shape: f32[40,128], index: 0, kind: input, shape index: {}]
  %s1 = inlined_call_operand.vmem [shape: f32[256,40], index: 1, kind: input, shape index: {}]
  %s2 = inlined_call_operand.vmem [shape: f32[256,1], index: 2, kind: input, shape index: {}]
  %s3 = inlined_call_operand.vmem [shape: f32[128,256], index: 3, kind: input, shape index: {}]
  %s4 = inlined_call_operand.vmem [shape: f32[128,1], index: 4, kind: input, shape index: {}]
  %s5 = inlined_call_operand.vmem [shape: f32[8,128], index: 5, kind: input, shape index: {}]
  %s6 = inlined_call_operand.<no memory space> [shape: f32[1,1], index: 6, kind: input, shape index: {}]
  %s7 = inlined_call_operand.hbm [shape: f32[1,128], index: 7, kind: output, shape index: {}]
  %s8 = sld [smem:[#allocation0]]
  $region38: #{tpu_custom_call.1} parent=0
    _
  %s10 = ssub.s32 1, %s8
  %s11 = scalar_select 0, %s10, %s8
  %v12 = vstv %s6
  %13 = vst [vmem:[#allocation2] sm:$0x1] %v12
  $region1: #{tpu_custom_call.1} parent=0
    #allocation3 [shape = 'u8[512]{0}', space=vmem, size = 0x400, scoped, tag = 'output window, operand 0, single buffered']
    #allocation4 [shape = 's32[1]{0}', space=sflag, size = 0x4, scoped, tag = 'scoped memory for tpu_custom_call.1']
    %14 = vsyncpa [#allocation4], 0
    // Predicated region
    $region2: #{tpu_custom_call.1} parent=1 // pred_check
      _
    $region3: #{tpu_custom_call.1} parent=1 // pred_check_branch
      %16 = sbr.rel (0) target = $region5
    $region4: #{tpu_custom_call.1} parent=1 // pred_region
      _
    $region5: #{tpu_custom_call.1} parent=1 // pred_fallthru
      _
    // Predicated region
    $region6: #{tpu_custom_call.1} parent=1 // pred_check
      _
    $region7: #{tpu_custom_call.1} parent=1 // pred_check_branch
      %18 = sbr.rel (0) target = $region9
    $region8: #{tpu_custom_call.1} parent=1 // pred_region
      _
    $region9: #{tpu_custom_call.1} parent=1 // pred_fallthru
      _
    // Predicated region
    $region10: #{tpu_custom_call.1} parent=1 // pred_check
      _
    $region11: #{tpu_custom_call.1} parent=1 // pred_check_branch
      %20 = sbr.rel (0) target = $region13
    $region12: #{tpu_custom_call.1} parent=1 // pred_region
      _
    $region13: #{tpu_custom_call.1} parent=1 // pred_fallthru
      _
    // Predicated region
    $region14: #{tpu_custom_call.1} parent=1 // pred_check
      _
    $region15: #{tpu_custom_call.1} parent=1 // pred_check_branch
      %22 = sbr.rel (0) target = $region17
    $region16: #{tpu_custom_call.1} parent=1 // pred_region
      _
    $region17: #{tpu_custom_call.1} parent=1 // pred_fallthru
      _
    // Predicated region
    $region18: #{tpu_custom_call.1} parent=1 // pred_check
      _
    $region19: #{tpu_custom_call.1} parent=1 // pred_check_branch
      %24 = sbr.rel (0) target = $region21
    $region20: #{tpu_custom_call.1} parent=1 // pred_region
      _
    $region21: #{tpu_custom_call.1} parent=1 // pred_fallthru
      _
    // Predicated region
    $region22: #{tpu_custom_call.1} parent=1 // pred_check
      _
    $region23: #{tpu_custom_call.1} parent=1 // pred_check_branch
      %26 = sbr.rel (0) target = $region25
    $region24: #{tpu_custom_call.1} parent=1 // pred_region
      _
    $region25: #{tpu_custom_call.1} parent=1 // pred_fallthru
      _
    // Predicated region
    $region26: #{tpu_custom_call.1} parent=1 // pred_check
      _
    $region27: #{tpu_custom_call.1} parent=1 // pred_check_branch
      %28 = sbr.rel (0) target = $region29
    $region28: #{tpu_custom_call.1} parent=1 // pred_region
      _
    $region29: #{tpu_custom_call.1} parent=1 // pred_fallthru
      _
    %v29 = vld [vmem:[%s1] sm:$0xff]
    %v30 = vld [vmem:[%s1 + $0x8] sm:$0xff]
    %v31 = vld [vmem:[%s1 + $0x10] sm:$0xff]
    %v32 = vld [vmem:[%s1 + $0x18] sm:$0xff]
    %v33 = vld [vmem:[%s1 + $0x20] sm:$0xff]
    %v34 = vld [vmem:[%s1 + $0x28] sm:$0xff]
    %v35 = vld [vmem:[%s1 + $0x30] sm:$0xff]
    %v36 = vld [vmem:[%s1 + $0x38] sm:$0xff]
    %v37 = vld [vmem:[%s1 + $0x40] sm:$0xff]
    %v38 = vld [vmem:[%s1 + $0x48] sm:$0xff]
    %v39 = vld [vmem:[%s1 + $0x50] sm:$0xff]
    %v40 = vld [vmem:[%s1 + $0x58] sm:$0xff]
    %v41 = vld [vmem:[%s1 + $0x60] sm:$0xff]
    %v42 = vld [vmem:[%s1 + $0x68] sm:$0xff]
    %v43 = vld [vmem:[%s1 + $0x70] sm:$0xff]
    %v44 = vld [vmem:[%s1 + $0x78] sm:$0xff]
    %v45 = vld [vmem:[%s1 + $0x80] sm:$0xff]
    %v46 = vld [vmem:[%s1 + $0x88] sm:$0xff]
    %v47 = vld [vmem:[%s1 + $0x90] sm:$0xff]
    %v48 = vld [vmem:[%s1 + $0x98] sm:$0xff]
    %v49 = vld [vmem:[%s1 + $0xa0] sm:$0xff]
    %v50 = vld [vmem:[%s1 + $0xa8] sm:$0xff]
    %v51 = vld [vmem:[%s1 + $0xb0] sm:$0xff]
    %v52 = vld [vmem:[%s1 + $0xb8] sm:$0xff]
    %v53 = vld [vmem:[%s1 + $0xc0] sm:$0xff]
    %v54 = vld [vmem:[%s1 + $0xc8] sm:$0xff]
    %v55 = vld [vmem:[%s1 + $0xd0] sm:$0xff]
    %v56 = vld [vmem:[%s1 + $0xd8] sm:$0xff]
    %v57 = vld [vmem:[%s1 + $0xe0] sm:$0xff]
    %v58 = vld [vmem:[%s1 + $0xe8] sm:$0xff]
    %v59 = vld [vmem:[%s1 + $0xf0] sm:$0xff]
    %v60 = vld [vmem:[%s1 + $0xf8] sm:$0xff]
    %v61 = vld [vmem:[%s0] sm:$0xff]
    %v62 = vld [vmem:[%s0 + $0x8] sm:$0xff]
    %v63 = vld [vmem:[%s0 + $0x10] sm:$0xff]
    %v64 = vld [vmem:[%s0 + $0x18] sm:$0xff]
    %v65 = vld [vmem:[%s0 + $0x20] sm:$0xff]
    %v66 = vld [vmem:[%s2] sm:$0xff]
    %v67 = vld [vmem:[%s2 + $0x8] sm:$0xff]
    %v68 = vld [vmem:[%s2 + $0x10] sm:$0xff]
    %v69 = vld [vmem:[%s2 + $0x18] sm:$0xff]
    %v70 = vld [vmem:[%s2 + $0x20] sm:$0xff]
    %v71 = vld [vmem:[%s2 + $0x28] sm:$0xff]
    %v72 = vld [vmem:[%s2 + $0x30] sm:$0xff]
    %v73 = vld [vmem:[%s2 + $0x38] sm:$0xff]
    %v74 = vld [vmem:[%s2 + $0x40] sm:$0xff]
    %v75 = vld [vmem:[%s2 + $0x48] sm:$0xff]
    %v76 = vld [vmem:[%s2 + $0x50] sm:$0xff]
    %v77 = vld [vmem:[%s2 + $0x58] sm:$0xff]
    %v78 = vld [vmem:[%s2 + $0x60] sm:$0xff]
    %v79 = vld [vmem:[%s2 + $0x68] sm:$0xff]
    %v80 = vld [vmem:[%s2 + $0x70] sm:$0xff]
    %v81 = vld [vmem:[%s2 + $0x78] sm:$0xff]
    %v82 = vld [vmem:[%s2 + $0x80] sm:$0xff]
    %v83 = vld [vmem:[%s2 + $0x88] sm:$0xff]
    %v84 = vld [vmem:[%s2 + $0x90] sm:$0xff]
    %v85 = vld [vmem:[%s2 + $0x98] sm:$0xff]
    %v86 = vld [vmem:[%s2 + $0xa0] sm:$0xff]
    %v87 = vld [vmem:[%s2 + $0xa8] sm:$0xff]
    %v88 = vld [vmem:[%s2 + $0xb0] sm:$0xff]
    %v89 = vld [vmem:[%s2 + $0xb8] sm:$0xff]
    %v90 = vld [vmem:[%s2 + $0xc0] sm:$0xff]
    %v91 = vld [vmem:[%s2 + $0xc8] sm:$0xff]
    %v92 = vld [vmem:[%s2 + $0xd0] sm:$0xff]
    %v93 = vld [vmem:[%s2 + $0xd8] sm:$0xff]
    %v94 = vld [vmem:[%s2 + $0xe0] sm:$0xff]
    %v95 = vld [vmem:[%s2 + $0xe8] sm:$0xff]
    %v96 = vld [vmem:[%s2 + $0xf0] sm:$0xff]
    %v97 = vld [vmem:[%s2 + $0xf8] sm:$0xff]
    %99 = vset.pattern.permute.xlu0 0
    %100 = vperm.xlu0 %99, %v66
    %v101 = vpop.permute.xlu0 %100
    %104 = vset.pattern.permute.xlu0 0
    %105 = vperm.xlu0 %104, %v67
    %v106 = vpop.permute.xlu0 %105
    %109 = vset.pattern.permute.xlu0 0
    %110 = vperm.xlu0 %109, %v68
    %v111 = vpop.permute.xlu0 %110
    %114 = vset.pattern.permute.xlu0 0
    %115 = vperm.xlu0 %114, %v69
    %v116 = vpop.permute.xlu0 %115
    %119 = vset.pattern.permute.xlu0 0
    %120 = vperm.xlu0 %119, %v70
    %v121 = vpop.permute.xlu0 %120
    %124 = vset.pattern.permute.xlu0 0
    %125 = vperm.xlu0 %124, %v71
    %v126 = vpop.permute.xlu0 %125
    %129 = vset.pattern.permute.xlu0 0
    %130 = vperm.xlu0 %129, %v72
    %v131 = vpop.permute.xlu0 %130
    %134 = vset.pattern.permute.xlu0 0
    %135 = vperm.xlu0 %134, %v73
    %v136 = vpop.permute.xlu0 %135
    %139 = vset.pattern.permute.xlu0 0
    %140 = vperm.xlu0 %139, %v74
    %v141 = vpop.permute.xlu0 %140
    %144 = vset.pattern.permute.xlu0 0
    %145 = vperm.xlu0 %144, %v75
    %v146 = vpop.permute.xlu0 %145
    %149 = vset.pattern.permute.xlu0 0
    %150 = vperm.xlu0 %149, %v76
    %v151 = vpop.permute.xlu0 %150
    %154 = vset.pattern.permute.xlu0 0
    %155 = vperm.xlu0 %154, %v77
    %v156 = vpop.permute.xlu0 %155
    %159 = vset.pattern.permute.xlu0 0
    %160 = vperm.xlu0 %159, %v78
    %v161 = vpop.permute.xlu0 %160
    %164 = vset.pattern.permute.xlu0 0
    %165 = vperm.xlu0 %164, %v79
    %v166 = vpop.permute.xlu0 %165
    %169 = vset.pattern.permute.xlu0 0
    %170 = vperm.xlu0 %169, %v80
    %v171 = vpop.permute.xlu0 %170
    %174 = vset.pattern.permute.xlu0 0
    %175 = vperm.xlu0 %174, %v81
    %v176 = vpop.permute.xlu0 %175
    %179 = vset.pattern.permute.xlu0 0
    %180 = vperm.xlu0 %179, %v82
    %v181 = vpop.permute.xlu0 %180
    %184 = vset.pattern.permute.xlu0 0
    %185 = vperm.xlu0 %184, %v83
    %v186 = vpop.permute.xlu0 %185
    %189 = vset.pattern.permute.xlu0 0
    %190 = vperm.xlu0 %189, %v84
    %v191 = vpop.permute.xlu0 %190
    %194 = vset.pattern.permute.xlu0 0
    %195 = vperm.xlu0 %194, %v85
    %v196 = vpop.permute.xlu0 %195
    %199 = vset.pattern.permute.xlu0 0
    %200 = vperm.xlu0 %199, %v86
    %v201 = vpop.permute.xlu0 %200
    %204 = vset.pattern.permute.xlu0 0
    %205 = vperm.xlu0 %204, %v87
    %v206 = vpop.permute.xlu0 %205
    %209 = vset.pattern.permute.xlu0 0
    %210 = vperm.xlu0 %209, %v88
    %v211 = vpop.permute.xlu0 %210
    %214 = vset.pattern.permute.xlu0 0
    %215 = vperm.xlu0 %214, %v89
    %v216 = vpop.permute.xlu0 %215
    %219 = vset.pattern.permute.xlu0 0
    %220 = vperm.xlu0 %219, %v90
    %v221 = vpop.permute.xlu0 %220
    %224 = vset.pattern.permute.xlu0 0
    %225 = vperm.xlu0 %224, %v91
    %v226 = vpop.permute.xlu0 %225
    %229 = vset.pattern.permute.xlu0 0
    %230 = vperm.xlu0 %229, %v92
    %v231 = vpop.permute.xlu0 %230
    %234 = vset.pattern.permute.xlu0 0
    %235 = vperm.xlu0 %234, %v93
    %v236 = vpop.permute.xlu0 %235
    %239 = vset.pattern.permute.xlu0 0
    %240 = vperm.xlu0 %239, %v94
    %v241 = vpop.permute.xlu0 %240
    %244 = vset.pattern.permute.xlu0 0
    %245 = vperm.xlu0 %244, %v95
    %v246 = vpop.permute.xlu0 %245
    %249 = vset.pattern.permute.xlu0 0
    %250 = vperm.xlu0 %249, %v96
    %v251 = vpop.permute.xlu0 %250
    %254 = vset.pattern.permute.xlu0 0
    %255 = vperm.xlu0 %254, %v97
    %v256 = vpop.permute.xlu0 %255
    %vm258 = vcmask 326656
    %v260 = vsel %vm258, %v29, 0
    %v263 = vsel %vm258, %v30, 0
    %v266 = vsel %vm258, %v31, 0
    %v269 = vsel %vm258, %v32, 0
    %v272 = vsel %vm258, %v33, 0
    %v275 = vsel %vm258, %v34, 0
    %v278 = vsel %vm258, %v35, 0
    %v281 = vsel %vm258, %v36, 0
    %v284 = vsel %vm258, %v37, 0
    %v287 = vsel %vm258, %v38, 0
    %v290 = vsel %vm258, %v39, 0
    %v293 = vsel %vm258, %v40, 0
    %v296 = vsel %vm258, %v41, 0
    %v299 = vsel %vm258, %v42, 0
    %v302 = vsel %vm258, %v43, 0
    %v305 = vsel %vm258, %v44, 0
    %v308 = vsel %vm258, %v45, 0
    %v311 = vsel %vm258, %v46, 0
    %v314 = vsel %vm258, %v47, 0
    %v317 = vsel %vm258, %v48, 0
    %v320 = vsel %vm258, %v49, 0
    %v323 = vsel %vm258, %v50, 0
    %v326 = vsel %vm258, %v51, 0
    %v329 = vsel %vm258, %v52, 0
    %v332 = vsel %vm258, %v53, 0
    %v335 = vsel %vm258, %v54, 0
    %v338 = vsel %vm258, %v55, 0
    %v341 = vsel %vm258, %v56, 0
    %v344 = vsel %vm258, %v57, 0
    %v347 = vsel %vm258, %v58, 0
    %v350 = vsel %vm258, %v59, 0
    %v353 = vsel %vm258, %v60, 0
    %355 = vmatprep.subr.mxu0 0.0
    %356 = vmatpush1.msra.mxu0 %v61
    %357 = vmatprep.subr.mxu0 0.0
    %358 = vmatpush1.msra.mxu0 %v62
    %359 = vmatprep.subr.mxu0 0.0
    %360 = vmatpush1.msra.mxu0 %v63
    %361 = vmatprep.subr.mxu0 0.0
    %362 = vmatpush1.msra.mxu0 %v64
    %363 = vmatprep.subr.mxu0 0.0
    %364 = vmatpush1.msra.mxu0 %v65
    %365 = vmatprep.subr.mxu0 0.0
    %366 = vmatpush1.msra.mxu0 0.0
    %367 = vmatprep.subr.mxu0 0.0
    %368 = vmatpush1.msra.mxu0 0.0
    %369 = vmatprep.subr.mxu0 0.0
    %370 = vmatpush1.msra.mxu0 0.0
    %371 = vmatprep.subr.mxu0 0.0
    %372 = vmatpush1.msra.mxu0 0.0
    %373 = vmatprep.subr.mxu0 0.0
    %374 = vmatpush1.msra.mxu0 0.0
    %375 = vmatprep.subr.mxu0 0.0
    %376 = vmatpush1.msra.mxu0 0.0
    %377 = vmatprep.subr.mxu0 0.0
    %378 = vmatpush1.msra.mxu0 0.0
    %379 = vmatprep.subr.mxu0 0.0
    %380 = vmatpush1.msra.mxu0 0.0
    %381 = vmatprep.subr.mxu0 0.0
    %382 = vmatpush1.msra.mxu0 0.0
    %383 = vmatprep.subr.mxu0 0.0
    %384 = vmatpush1.msra.mxu0 0.0
    %385 = vmatprep.subr.mxu0 0.0
    %386 = vmatpush1.msra.mxu0 0.0
    %387 = vmatprep.subr.mxu0 0.0
    %388 = vmatpush1.msra.mxu0 0.0
    %389 = vmatprep.subr.mxu0 0.0
    %390 = vmatpush1.msra.mxu0 0.0
    %391 = vmatprep.subr.mxu0 0.0
    %392 = vmatpush1.msra.mxu0 0.0
    %393 = vmatprep.subr.mxu0 0.0
    %394 = vmatpush1.msra.mxu0 0.0
    %395 = vmatprep.subr.mxu0 0.0
    %396 = vmatpush1.msra.mxu0 0.0
    %397 = vmatprep.subr.mxu0 0.0
    %398 = vmatpush1.msra.mxu0 0.0
    %399 = vmatprep.subr.mxu0 0.0
    %400 = vmatpush1.msra.mxu0 0.0
    %401 = vmatprep.subr.mxu0 0.0
    %402 = vmatpush1.msra.mxu0 0.0
    %403 = vmatprep.subr.mxu0 0.0
    %404 = vmatpush1.msra.mxu0 0.0
    %405 = vmatprep.subr.mxu0 0.0
    %406 = vmatpush1.msra.mxu0 0.0
    %407 = vmatprep.subr.mxu0 0.0
    %408 = vmatpush1.msra.mxu0 0.0
    %409 = vmatprep.subr.mxu0 0.0
    %410 = vmatpush1.msra.mxu0 0.0
    %411 = vmatprep.subr.mxu0 0.0
    %412 = vmatpush1.msra.mxu0 0.0
    %413 = vmatprep.subr.mxu0 0.0
    %414 = vmatpush1.msra.mxu0 0.0
    %415 = vmatprep.subr.mxu0 0.0
    %416 = vmatpush1.msra.mxu0 0.0
    %417 = vmatprep.subr.mxu0 0.0
    %418 = vmatpush1.msra.mxu0 0.0
    %419 = vmatprep.mubr.f32.mxu0 0.0
    %420 = vmatmul.mubr.f32.gmra.mrb[0].mxu0 %v260
    %v421 = vpop.f32.mrb[0].mxu0
    %v422 = vadd.f32 %v101, %v421
    %v423 = vpop.f32.mrb[0].mxu0
    %424 = vmatprep.mubr.f32.mxu0 0.0
    %425 = vmatmul.mubr.f32.gmra.mrb[0].mxu0 %v263
    %v426 = vpop.f32.mrb[0].mxu0
    %v427 = vadd.f32 %v106, %v426
    %v428 = vpop.f32.mrb[0].mxu0
    %429 = vmatprep.mubr.f32.mxu0 0.0
    %430 = vmatmul.mubr.f32.gmra.mrb[0].mxu0 %v266
    %v431 = vpop.f32.mrb[0].mxu0
    %v432 = vadd.f32 %v111, %v431
    %v433 = vpop.f32.mrb[0].mxu0
    %434 = vmatprep.mubr.f32.mxu0 0.0
    %435 = vmatmul.mubr.f32.gmra.mrb[0].mxu0 %v269
    %v436 = vpop.f32.mrb[0].mxu0
    %v437 = vadd.f32 %v116, %v436
    %v438 = vpop.f32.mrb[0].mxu0
    %439 = vmatprep.mubr.f32.mxu0 0.0
    %440 = vmatmul.mubr.f32.gmra.mrb[0].mxu0 %v272
    %v441 = vpop.f32.mrb[0].mxu0
    %v442 = vadd.f32 %v121, %v441
    %v443 = vpop.f32.mrb[0].mxu0
    %444 = vmatprep.mubr.f32.mxu0 0.0
    %445 = vmatmul.mubr.f32.gmra.mrb[0].mxu0 %v275
    %v446 = vpop.f32.mrb[0].mxu0
    %v447 = vadd.f32 %v126, %v446
    %v448 = vpop.f32.mrb[0].mxu0
    %449 = vmatprep.mubr.f32.mxu0 0.0
    %450 = vmatmul.mubr.f32.gmra.mrb[0].mxu0 %v278
    %v451 = vpop.f32.mrb[0].mxu0
    %v452 = vadd.f32 %v131, %v451
    %v453 = vpop.f32.mrb[0].mxu0
    %454 = vmatprep.mubr.f32.mxu0 0.0
    %455 = vmatmul.mubr.f32.gmra.mrb[0].mxu0 %v281
    %v456 = vpop.f32.mrb[0].mxu0
    %v457 = vadd.f32 %v136, %v456
    %v458 = vpop.f32.mrb[0].mxu0
    %459 = vmatprep.mubr.f32.mxu0 0.0
    %460 = vmatmul.mubr.f32.gmra.mrb[0].mxu0 %v284
    %v461 = vpop.f32.mrb[0].mxu0
    %v462 = vadd.f32 %v141, %v461
    %v463 = vpop.f32.mrb[0].mxu0
    %464 = vmatprep.mubr.f32.mxu0 0.0
    %465 = vmatmul.mubr.f32.gmra.mrb[0].mxu0 %v287
    %v466 = vpop.f32.mrb[0].mxu0
    %v467 = vadd.f32 %v146, %v466
    %v468 = vpop.f32.mrb[0].mxu0
    %469 = vmatprep.mubr.f32.mxu0 0.0
    %470 = vmatmul.mubr.f32.gmra.mrb[0].mxu0 %v290
    %v471 = vpop.f32.mrb[0].mxu0
    %v472 = vadd.f32 %v151, %v471
    %v473 = vpop.f32.mrb[0].mxu0
    %474 = vmatprep.mubr.f32.mxu0 0.0
    %475 = vmatmul.mubr.f32.gmra.mrb[0].mxu0 %v293
    %v476 = vpop.f32.mrb[0].mxu0
    %v477 = vadd.f32 %v156, %v476
    %v478 = vpop.f32.mrb[0].mxu0
    %479 = vmatprep.mubr.f32.mxu0 0.0
    %480 = vmatmul.mubr.f32.gmra.mrb[0].mxu0 %v296
    %v481 = vpop.f32.mrb[0].mxu0
    %v482 = vadd.f32 %v161, %v481
    %v483 = vpop.f32.mrb[0].mxu0
    %484 = vmatprep.mubr.f32.mxu0 0.0
    %485 = vmatmul.mubr.f32.gmra.mrb[0].mxu0 %v299
    %v486 = vpop.f32.mrb[0].mxu0
    %v487 = vadd.f32 %v166, %v486
    %v488 = vpop.f32.mrb[0].mxu0
    %489 = vmatprep.mubr.f32.mxu0 0.0
    %490 = vmatmul.mubr.f32.gmra.mrb[0].mxu0 %v302
    %v491 = vpop.f32.mrb[0].mxu0
    %v492 = vadd.f32 %v171, %v491
    %v493 = vpop.f32.mrb[0].mxu0
    %494 = vmatprep.mubr.f32.mxu0 0.0
    %495 = vmatmul.mubr.f32.gmra.mrb[0].mxu0 %v305
    %v496 = vpop.f32.mrb[0].mxu0
    %v497 = vadd.f32 %v176, %v496
    %v498 = vpop.f32.mrb[0].mxu0
    %499 = vmatprep.mubr.f32.mxu0 0.0
    %500 = vmatmul.mubr.f32.gmra.mrb[0].mxu0 %v308
    %v501 = vpop.f32.mrb[0].mxu0
    %v502 = vadd.f32 %v181, %v501
    %v503 = vpop.f32.mrb[0].mxu0
    %504 = vmatprep.mubr.f32.mxu0 0.0
    %505 = vmatmul.mubr.f32.gmra.mrb[0].mxu0 %v311
    %v506 = vpop.f32.mrb[0].mxu0
    %v507 = vadd.f32 %v186, %v506
    %v508 = vpop.f32.mrb[0].mxu0
    %509 = vmatprep.mubr.f32.mxu0 0.0
    %510 = vmatmul.mubr.f32.gmra.mrb[0].mxu0 %v314
    %v511 = vpop.f32.mrb[0].mxu0
    %v512 = vadd.f32 %v191, %v511
    %v513 = vpop.f32.mrb[0].mxu0
    %514 = vmatprep.mubr.f32.mxu0 0.0
    %515 = vmatmul.mubr.f32.gmra.mrb[0].mxu0 %v317
    %v516 = vpop.f32.mrb[0].mxu0
    %v517 = vadd.f32 %v196, %v516
    %v518 = vpop.f32.mrb[0].mxu0
    %519 = vmatprep.mubr.f32.mxu0 0.0
    %520 = vmatmul.mubr.f32.gmra.mrb[0].mxu0 %v320
    %v521 = vpop.f32.mrb[0].mxu0
    %v522 = vadd.f32 %v201, %v521
    %v523 = vpop.f32.mrb[0].mxu0
    %524 = vmatprep.mubr.f32.mxu0 0.0
    %525 = vmatmul.mubr.f32.gmra.mrb[0].mxu0 %v323
    %v526 = vpop.f32.mrb[0].mxu0
    %v527 = vadd.f32 %v206, %v526
    %v528 = vpop.f32.mrb[0].mxu0
    %529 = vmatprep.mubr.f32.mxu0 0.0
    %530 = vmatmul.mubr.f32.gmra.mrb[0].mxu0 %v326
    %v531 = vpop.f32.mrb[0].mxu0
    %v532 = vadd.f32 %v211, %v531
    %v533 = vpop.f32.mrb[0].mxu0
    %534 = vmatprep.mubr.f32.mxu0 0.0
    %535 = vmatmul.mubr.f32.gmra.mrb[0].mxu0 %v329
    %v536 = vpop.f32.mrb[0].mxu0
    %v537 = vadd.f32 %v216, %v536
    %v538 = vpop.f32.mrb[0].mxu0
    %539 = vmatprep.mubr.f32.mxu0 0.0
    %540 = vmatmul.mubr.f32.gmra.mrb[0].mxu0 %v332
    %v541 = vpop.f32.mrb[0].mxu0
    %v542 = vadd.f32 %v221, %v541
    %v543 = vpop.f32.mrb[0].mxu0
    %544 = vmatprep.mubr.f32.mxu0 0.0
    %545 = vmatmul.mubr.f32.gmra.mrb[0].mxu0 %v335
    %v546 = vpop.f32.mrb[0].mxu0
    %v547 = vadd.f32 %v226, %v546
    %v548 = vpop.f32.mrb[0].mxu0
    %549 = vmatprep.mubr.f32.mxu0 0.0
    %550 = vmatmul.mubr.f32.gmra.mrb[0].mxu0 %v338
    %v551 = vpop.f32.mrb[0].mxu0
    %v552 = vadd.f32 %v231, %v551
    %v553 = vpop.f32.mrb[0].mxu0
    %554 = vmatprep.mubr.f32.mxu0 0.0
    %555 = vmatmul.mubr.f32.gmra.mrb[0].mxu0 %v341
    %v556 = vpop.f32.mrb[0].mxu0
    %v557 = vadd.f32 %v236, %v556
    %v558 = vpop.f32.mrb[0].mxu0
    %559 = vmatprep.mubr.f32.mxu0 0.0
    %560 = vmatmul.mubr.f32.gmra.mrb[0].mxu0 %v344
    %v561 = vpop.f32.mrb[0].mxu0
    %v562 = vadd.f32 %v241, %v561
    %v563 = vpop.f32.mrb[0].mxu0
    %564 = vmatprep.mubr.f32.mxu0 0.0
    %565 = vmatmul.mubr.f32.gmra.mrb[0].mxu0 %v347
    %v566 = vpop.f32.mrb[0].mxu0
    %v567 = vadd.f32 %v246, %v566
    %v568 = vpop.f32.mrb[0].mxu0
    %569 = vmatprep.mubr.f32.mxu0 0.0
    %570 = vmatmul.mubr.f32.gmra.mrb[0].mxu0 %v350
    %v571 = vpop.f32.mrb[0].mxu0
    %v572 = vadd.f32 %v251, %v571
    %v573 = vpop.f32.mrb[0].mxu0
    %574 = vmatprep.mubr.f32.mxu0 0.0
    %575 = vmatmul.mubr.f32.gmra.mrb[0].mxu0 %v353
    %v576 = vpop.f32.mrb[0].mxu0
    %v577 = vadd.f32 %v256, %v576
    %v578 = vpop.f32.mrb[0].mxu0
    %579 = vdwg.mxu0
    %vm580 = vcmp.gt.f32.partialorder %v422, 0.0
    %vm581 = vcmp.gt.f32.partialorder %v427, 0.0
    %vm582 = vcmp.gt.f32.partialorder %v432, 0.0
    %vm583 = vcmp.gt.f32.partialorder %v437, 0.0
    %vm584 = vcmp.gt.f32.partialorder %v442, 0.0
    %vm585 = vcmp.gt.f32.partialorder %v447, 0.0
    %vm586 = vcmp.gt.f32.partialorder %v452, 0.0
    %vm587 = vcmp.gt.f32.partialorder %v457, 0.0
    %vm588 = vcmp.gt.f32.partialorder %v462, 0.0
    %vm589 = vcmp.gt.f32.partialorder %v467, 0.0
    %vm590 = vcmp.gt.f32.partialorder %v472, 0.0
    %vm591 = vcmp.gt.f32.partialorder %v477, 0.0
    %vm592 = vcmp.gt.f32.partialorder %v482, 0.0
    %vm593 = vcmp.gt.f32.partialorder %v487, 0.0
    %vm594 = vcmp.gt.f32.partialorder %v492, 0.0
    %vm595 = vcmp.gt.f32.partialorder %v497, 0.0
    %vm596 = vcmp.gt.f32.partialorder %v502, 0.0
    %vm597 = vcmp.gt.f32.partialorder %v507, 0.0
    %vm598 = vcmp.gt.f32.partialorder %v512, 0.0
    %vm599 = vcmp.gt.f32.partialorder %v517, 0.0
    %vm600 = vcmp.gt.f32.partialorder %v522, 0.0
    %vm601 = vcmp.gt.f32.partialorder %v527, 0.0
    %vm602 = vcmp.gt.f32.partialorder %v532, 0.0
    %vm603 = vcmp.gt.f32.partialorder %v537, 0.0
    %vm604 = vcmp.gt.f32.partialorder %v542, 0.0
    %vm605 = vcmp.gt.f32.partialorder %v547, 0.0
    %vm606 = vcmp.gt.f32.partialorder %v552, 0.0
    %vm607 = vcmp.gt.f32.partialorder %v557, 0.0
    %vm608 = vcmp.gt.f32.partialorder %v562, 0.0
    %vm609 = vcmp.gt.f32.partialorder %v567, 0.0
    %vm610 = vcmp.gt.f32.partialorder %v572, 0.0
    %vm611 = vcmp.gt.f32.partialorder %v577, 0.0
    %v612 = vmul.f32 %v422, 0.2
    %v613 = vmul.f32 %v427, 0.2
    %v614 = vmul.f32 %v432, 0.2
    %v615 = vmul.f32 %v437, 0.2
    %v616 = vmul.f32 %v442, 0.2
    %v617 = vmul.f32 %v447, 0.2
    %v618 = vmul.f32 %v452, 0.2
    %v619 = vmul.f32 %v457, 0.2
    %v620 = vmul.f32 %v462, 0.2
    %v621 = vmul.f32 %v467, 0.2
    %v622 = vmul.f32 %v472, 0.2
    %v623 = vmul.f32 %v477, 0.2
    %v624 = vmul.f32 %v482, 0.2
    %v625 = vmul.f32 %v487, 0.2
    %v626 = vmul.f32 %v492, 0.2
    %v627 = vmul.f32 %v497, 0.2
    %v628 = vmul.f32 %v502, 0.2
    %v629 = vmul.f32 %v507, 0.2
    %v630 = vmul.f32 %v512, 0.2
    %v631 = vmul.f32 %v517, 0.2
    %v632 = vmul.f32 %v522, 0.2
    %v633 = vmul.f32 %v527, 0.2
    %v634 = vmul.f32 %v532, 0.2
    %v635 = vmul.f32 %v537, 0.2
    %v636 = vmul.f32 %v542, 0.2
    %v637 = vmul.f32 %v547, 0.2
    %v638 = vmul.f32 %v552, 0.2
    %v639 = vmul.f32 %v557, 0.2
    %v640 = vmul.f32 %v562, 0.2
    %v641 = vmul.f32 %v567, 0.2
    %v642 = vmul.f32 %v572, 0.2
    %v643 = vmul.f32 %v577, 0.2
    %v644 = vsel %vm580, %v422, %v612
    %v645 = vsel %vm581, %v427, %v613
    %v646 = vsel %vm582, %v432, %v614
    %v647 = vsel %vm583, %v437, %v615
    %v648 = vsel %vm584, %v442, %v616
    %v649 = vsel %vm585, %v447, %v617
    %v650 = vsel %vm586, %v452, %v618
    %v651 = vsel %vm587, %v457, %v619
    %v652 = vsel %vm588, %v462, %v620
    %v653 = vsel %vm589, %v467, %v621
    %v654 = vsel %vm590, %v472, %v622
    %v655 = vsel %vm591, %v477, %v623
    %v656 = vsel %vm592, %v482, %v624
    %v657 = vsel %vm593, %v487, %v625
    %v658 = vsel %vm594, %v492, %v626
    %v659 = vsel %vm595, %v497, %v627
    %v660 = vsel %vm596, %v502, %v628
    %v661 = vsel %vm597, %v507, %v629
    %v662 = vsel %vm598, %v512, %v630
    %v663 = vsel %vm599, %v517, %v631
    %v664 = vsel %vm600, %v522, %v632
    %v665 = vsel %vm601, %v527, %v633
    %v666 = vsel %vm602, %v532, %v634
    %v667 = vsel %vm603, %v537, %v635
    %v668 = vsel %vm604, %v542, %v636
    %v669 = vsel %vm605, %v547, %v637
    %v670 = vsel %vm606, %v552, %v638
    %v671 = vsel %vm607, %v557, %v639
    %v672 = vsel %vm608, %v562, %v640
    %v673 = vsel %vm609, %v567, %v641
    %v674 = vsel %vm610, %v572, %v642
    %v675 = vsel %vm611, %v577, %v643
    %v676 = vld [vmem:[%s3] sm:$0xff]
    %v677 = vld [vmem:[%s3 + $0x8] sm:$0xff]
    %v678 = vld [vmem:[%s3 + $0x10] sm:$0xff]
    %v679 = vld [vmem:[%s3 + $0x18] sm:$0xff]
    %v680 = vld [vmem:[%s3 + $0x20] sm:$0xff]
    %v681 = vld [vmem:[%s3 + $0x28] sm:$0xff]
    %v682 = vld [vmem:[%s3 + $0x30] sm:$0xff]
    %v683 = vld [vmem:[%s3 + $0x38] sm:$0xff]
    %v684 = vld [vmem:[%s3 + $0x40] sm:$0xff]
    %v685 = vld [vmem:[%s3 + $0x48] sm:$0xff]
    %v686 = vld [vmem:[%s3 + $0x50] sm:$0xff]
    %v687 = vld [vmem:[%s3 + $0x58] sm:$0xff]
    %v688 = vld [vmem:[%s3 + $0x60] sm:$0xff]
    %v689 = vld [vmem:[%s3 + $0x68] sm:$0xff]
    %v690 = vld [vmem:[%s3 + $0x70] sm:$0xff]
    %v691 = vld [vmem:[%s3 + $0x78] sm:$0xff]
    %v692 = vld [vmem:[%s3 + $0x80] sm:$0xff]
    %v693 = vld [vmem:[%s3 + $0x88] sm:$0xff]
    %v694 = vld [vmem:[%s3 + $0x90] sm:$0xff]
    %v695 = vld [vmem:[%s3 + $0x98] sm:$0xff]
    %v696 = vld [vmem:[%s3 + $0xa0] sm:$0xff]
    %v697 = vld [vmem:[%s3 + $0xa8] sm:$0xff]
    %v698 = vld [vmem:[%s3 + $0xb0] sm:$0xff]
    %v699 = vld [vmem:[%s3 + $0xb8] sm:$0xff]
    %v700 = vld [vmem:[%s3 + $0xc0] sm:$0xff]
    %v701 = vld [vmem:[%s3 + $0xc8] sm:$0xff]
    %v702 = vld [vmem:[%s3 + $0xd0] sm:$0xff]
    %v703 = vld [vmem:[%s3 + $0xd8] sm:$0xff]
    %v704 = vld [vmem:[%s3 + $0xe0] sm:$0xff]
    %v705 = vld [vmem:[%s3 + $0xe8] sm:$0xff]
    %v706 = vld [vmem:[%s3 + $0xf0] sm:$0xff]
    %v707 = vld [vmem:[%s3 + $0xf8] sm:$0xff]
    %v708 = vld [vmem:[%s4] sm:$0xff]
    %v709 = vld [vmem:[%s4 + $0x8] sm:$0xff]
    %v710 = vld [vmem:[%s4 + $0x10] sm:$0xff]
    %v711 = vld [vmem:[%s4 + $0x18] sm:$0xff]
    %v712 = vld [vmem:[%s4 + $0x20] sm:$0xff]
    %v713 = vld [vmem:[%s4 + $0x28] sm:$0xff]
    %v714 = vld [vmem:[%s4 + $0x30] sm:$0xff]
    %v715 = vld [vmem:[%s4 + $0x38] sm:$0xff]
    %v716 = vld [vmem:[%s4 + $0x40] sm:$0xff]
    %v717 = vld [vmem:[%s4 + $0x48] sm:$0xff]
    %v718 = vld [vmem:[%s4 + $0x50] sm:$0xff]
    %v719 = vld [vmem:[%s4 + $0x58] sm:$0xff]
    %v720 = vld [vmem:[%s4 + $0x60] sm:$0xff]
    %v721 = vld [vmem:[%s4 + $0x68] sm:$0xff]
    %v722 = vld [vmem:[%s4 + $0x70] sm:$0xff]
    %v723 = vld [vmem:[%s4 + $0x78] sm:$0xff]
    %725 = vset.pattern.permute.xlu0 0
    %726 = vperm.xlu0 %725, %v708
    %v727 = vpop.permute.xlu0 %726
    %730 = vset.pattern.permute.xlu0 0
    %731 = vperm.xlu0 %730, %v709
    %v732 = vpop.permute.xlu0 %731
    %735 = vset.pattern.permute.xlu0 0
    %736 = vperm.xlu0 %735, %v710
    %v737 = vpop.permute.xlu0 %736
    %740 = vset.pattern.permute.xlu0 0
    %741 = vperm.xlu0 %740, %v711
    %v742 = vpop.permute.xlu0 %741
    %745 = vset.pattern.permute.xlu0 0
    %746 = vperm.xlu0 %745, %v712
    %v747 = vpop.permute.xlu0 %746
    %750 = vset.pattern.permute.xlu0 0
    %751 = vperm.xlu0 %750, %v713
    %v752 = vpop.permute.xlu0 %751
    %755 = vset.pattern.permute.xlu0 0
    %756 = vperm.xlu0 %755, %v714
    %v757 = vpop.permute.xlu0 %756
    %760 = vset.pattern.permute.xlu0 0
    %761 = vperm.xlu0 %760, %v715
    %v762 = vpop.permute.xlu0 %761
    %765 = vset.pattern.permute.xlu0 0
    %766 = vperm.xlu0 %765, %v716
    %v767 = vpop.permute.xlu0 %766
    %770 = vset.pattern.permute.xlu0 0
    %771 = vperm.xlu0 %770, %v717
    %v772 = vpop.permute.xlu0 %771
    %775 = vset.pattern.permute.xlu0 0
    %776 = vperm.xlu0 %775, %v718
    %v777 = vpop.permute.xlu0 %776
    %780 = vset.pattern.permute.xlu0 0
    %781 = vperm.xlu0 %780, %v719
    %v782 = vpop.permute.xlu0 %781
    %785 = vset.pattern.permute.xlu0 0
    %786 = vperm.xlu0 %785, %v720
    %v787 = vpop.permute.xlu0 %786
    %790 = vset.pattern.permute.xlu0 0
    %791 = vperm.xlu0 %790, %v721
    %v792 = vpop.permute.xlu0 %791
    %795 = vset.pattern.permute.xlu0 0
    %796 = vperm.xlu0 %795, %v722
    %v797 = vpop.permute.xlu0 %796
    %800 = vset.pattern.permute.xlu0 0
    %801 = vperm.xlu0 %800, %v723
    %v802 = vpop.permute.xlu0 %801
    %804 = vmatprep.subr.mxu0 0.0
    %805 = vmatpush1.msra.mxu0 %v644
    %806 = vmatprep.subr.mxu0 0.0
    %807 = vmatpush1.msra.mxu0 %v645
    %808 = vmatprep.subr.mxu0 0.0
    %809 = vmatpush1.msra.mxu0 %v646
    %810 = vmatprep.subr.mxu0 0.0
    %811 = vmatpush1.msra.mxu0 %v647
    %812 = vmatprep.subr.mxu0 0.0
    %813 = vmatpush1.msra.mxu0 %v648
    %814 = vmatprep.subr.mxu0 0.0
    %815 = vmatpush1.msra.mxu0 %v649
    %816 = vmatprep.subr.mxu0 0.0
    %817 = vmatpush1.msra.mxu0 %v650
    %818 = vmatprep.subr.mxu0 0.0
    %819 = vmatpush1.msra.mxu0 %v651
    %820 = vmatprep.subr.mxu0 0.0
    %821 = vmatpush1.msra.mxu0 %v652
    %822 = vmatprep.subr.mxu0 0.0
    %823 = vmatpush1.msra.mxu0 %v653
    %824 = vmatprep.subr.mxu0 0.0
    %825 = vmatpush1.msra.mxu0 %v654
    %826 = vmatprep.subr.mxu0 0.0
    %827 = vmatpush1.msra.mxu0 %v655
    %828 = vmatprep.subr.mxu0 0.0
    %829 = vmatpush1.msra.mxu0 %v656
    %830 = vmatprep.subr.mxu0 0.0
    %831 = vmatpush1.msra.mxu0 %v657
    %832 = vmatprep.subr.mxu0 0.0
    %833 = vmatpush1.msra.mxu0 %v658
    %834 = vmatprep.subr.mxu0 0.0
    %835 = vmatpush1.msra.mxu0 %v659
    %836 = vmatprep.subr.mxu0 0.0
    %837 = vmatpush1.msra.mxu0 %v660
    %838 = vmatprep.subr.mxu0 0.0
    %839 = vmatpush1.msra.mxu0 %v661
    %840 = vmatprep.subr.mxu0 0.0
    %841 = vmatpush1.msra.mxu0 %v662
    %842 = vmatprep.subr.mxu0 0.0
    %843 = vmatpush1.msra.mxu0 %v663
    %844 = vmatprep.subr.mxu0 0.0
    %845 = vmatpush1.msra.mxu0 %v664
    %846 = vmatprep.subr.mxu0 0.0
    %847 = vmatpush1.msra.mxu0 %v665
    %848 = vmatprep.subr.mxu0 0.0
    %849 = vmatpush1.msra.mxu0 %v666
    %850 = vmatprep.subr.mxu0 0.0
    %851 = vmatpush1.msra.mxu0 %v667
    %852 = vmatprep.subr.mxu0 0.0
    %853 = vmatpush1.msra.mxu0 %v668
    %854 = vmatprep.subr.mxu0 0.0
    %855 = vmatpush1.msra.mxu0 %v669
    %856 = vmatprep.subr.mxu0 0.0
    %857 = vmatpush1.msra.mxu0 %v670
    %858 = vmatprep.subr.mxu0 0.0
    %859 = vmatpush1.msra.mxu0 %v671
    %860 = vmatprep.subr.mxu0 0.0
    %861 = vmatpush1.msra.mxu0 %v672
    %862 = vmatprep.subr.mxu0 0.0
    %863 = vmatpush1.msra.mxu0 %v673
    %864 = vmatprep.subr.mxu0 0.0
    %865 = vmatpush1.msra.mxu0 %v674
    %866 = vmatprep.subr.mxu0 0.0
    %867 = vmatpush1.msra.mxu0 %v675
    %868 = vmatprep.mubr.f32.mxu0 %v677
    %869 = vmatmul.mubr.f32.gmra.mrb[0].mxu0 %v676
    %v870 = vpop.f32.mrb[0].mxu0
    %v871 = vadd.f32 %v727, %v870
    %v872 = vpop.f32.mrb[0].mxu0
    %873 = vmatprep.mubr.f32.mxu0 %v679
    %874 = vmatmul.mubr.f32.gmra.mrb[0].mxu0 %v678
    %v875 = vpop.f32.mrb[0].mxu0
    %v876 = vadd.f32 %v732, %v875
    %v877 = vpop.f32.mrb[0].mxu0
    %878 = vmatprep.mubr.f32.mxu0 %v681
    %879 = vmatmul.mubr.f32.gmra.mrb[0].mxu0 %v680
    %v880 = vpop.f32.mrb[0].mxu0
    %v881 = vadd.f32 %v737, %v880
    %v882 = vpop.f32.mrb[0].mxu0
    %883 = vmatprep.mubr.f32.mxu0 %v683
    %884 = vmatmul.mubr.f32.gmra.mrb[0].mxu0 %v682
    %v885 = vpop.f32.mrb[0].mxu0
    %v886 = vadd.f32 %v742, %v885
    %v887 = vpop.f32.mrb[0].mxu0
    %888 = vmatprep.mubr.f32.mxu0 %v685
    %889 = vmatmul.mubr.f32.gmra.mrb[0].mxu0 %v684
    %v890 = vpop.f32.mrb[0].mxu0
    %v891 = vadd.f32 %v747, %v890
    %v892 = vpop.f32.mrb[0].mxu0
    %893 = vmatprep.mubr.f32.mxu0 %v687
    %894 = vmatmul.mubr.f32.gmra.mrb[0].mxu0 %v686
    %v895 = vpop.f32.mrb[0].mxu0
    %v896 = vadd.f32 %v752, %v895
    %v897 = vpop.f32.mrb[0].mxu0
    %898 = vmatprep.mubr.f32.mxu0 %v689
    %899 = vmatmul.mubr.f32.gmra.mrb[0].mxu0 %v688
    %v900 = vpop.f32.mrb[0].mxu0
    %v901 = vadd.f32 %v757, %v900
    %v902 = vpop.f32.mrb[0].mxu0
    %903 = vmatprep.mubr.f32.mxu0 %v691
    %904 = vmatmul.mubr.f32.gmra.mrb[0].mxu0 %v690
    %v905 = vpop.f32.mrb[0].mxu0
    %v906 = vadd.f32 %v762, %v905
    %v907 = vpop.f32.mrb[0].mxu0
    %908 = vmatprep.mubr.f32.mxu0 %v693
    %909 = vmatmul.mubr.f32.gmra.mrb[0].mxu0 %v692
    %v910 = vpop.f32.mrb[0].mxu0
    %v911 = vadd.f32 %v767, %v910
    %v912 = vpop.f32.mrb[0].mxu0
    %913 = vmatprep.mubr.f32.mxu0 %v695
    %914 = vmatmul.mubr.f32.gmra.mrb[0].mxu0 %v694
    %v915 = vpop.f32.mrb[0].mxu0
    %v916 = vadd.f32 %v772, %v915
    %v917 = vpop.f32.mrb[0].mxu0
    %918 = vmatprep.mubr.f32.mxu0 %v697
    %919 = vmatmul.mubr.f32.gmra.mrb[0].mxu0 %v696
    %v920 = vpop.f32.mrb[0].mxu0
    %v921 = vadd.f32 %v777, %v920
    %v922 = vpop.f32.mrb[0].mxu0
    %923 = vmatprep.mubr.f32.mxu0 %v699
    %924 = vmatmul.mubr.f32.gmra.mrb[0].mxu0 %v698
    %v925 = vpop.f32.mrb[0].mxu0
    %v926 = vadd.f32 %v782, %v925
    %v927 = vpop.f32.mrb[0].mxu0
    %928 = vmatprep.mubr.f32.mxu0 %v701
    %929 = vmatmul.mubr.f32.gmra.mrb[0].mxu0 %v700
    %v930 = vpop.f32.mrb[0].mxu0
    %v931 = vadd.f32 %v787, %v930
    %v932 = vpop.f32.mrb[0].mxu0
    %933 = vmatprep.mubr.f32.mxu0 %v703
    %934 = vmatmul.mubr.f32.gmra.mrb[0].mxu0 %v702
    %v935 = vpop.f32.mrb[0].mxu0
    %v936 = vadd.f32 %v792, %v935
    %v937 = vpop.f32.mrb[0].mxu0
    %938 = vmatprep.mubr.f32.mxu0 %v705
    %939 = vmatmul.mubr.f32.gmra.mrb[0].mxu0 %v704
    %v940 = vpop.f32.mrb[0].mxu0
    %v941 = vadd.f32 %v797, %v940
    %v942 = vpop.f32.mrb[0].mxu0
    %943 = vmatprep.mubr.f32.mxu0 %v707
    %944 = vmatmul.mubr.f32.gmra.mrb[0].mxu0 %v706
    %v945 = vpop.f32.mrb[0].mxu0
    %v946 = vadd.f32 %v802, %v945
    %v947 = vpop.f32.mrb[0].mxu0
    %948 = vdwg.mxu0
    %vm949 = vcmp.gt.f32.partialorder %v871, 0.0
    %vm950 = vcmp.gt.f32.partialorder %v876, 0.0
    %vm951 = vcmp.gt.f32.partialorder %v881, 0.0
    %vm952 = vcmp.gt.f32.partialorder %v886, 0.0
    %vm953 = vcmp.gt.f32.partialorder %v891, 0.0
    %vm954 = vcmp.gt.f32.partialorder %v896, 0.0
    %vm955 = vcmp.gt.f32.partialorder %v901, 0.0
    %vm956 = vcmp.gt.f32.partialorder %v906, 0.0
    %vm957 = vcmp.gt.f32.partialorder %v911, 0.0
    %vm958 = vcmp.gt.f32.partialorder %v916, 0.0
    %vm959 = vcmp.gt.f32.partialorder %v921, 0.0
    %vm960 = vcmp.gt.f32.partialorder %v926, 0.0
    %vm961 = vcmp.gt.f32.partialorder %v931, 0.0
    %vm962 = vcmp.gt.f32.partialorder %v936, 0.0
    %vm963 = vcmp.gt.f32.partialorder %v941, 0.0
    %vm964 = vcmp.gt.f32.partialorder %v946, 0.0
    %v965 = vmul.f32 %v871, 0.2
    %v966 = vmul.f32 %v876, 0.2
    %v967 = vmul.f32 %v881, 0.2
    %v968 = vmul.f32 %v886, 0.2
    %v969 = vmul.f32 %v891, 0.2
    %v970 = vmul.f32 %v896, 0.2
    %v971 = vmul.f32 %v901, 0.2
    %v972 = vmul.f32 %v906, 0.2
    %v973 = vmul.f32 %v911, 0.2
    %v974 = vmul.f32 %v916, 0.2
    %v975 = vmul.f32 %v921, 0.2
    %v976 = vmul.f32 %v926, 0.2
    %v977 = vmul.f32 %v931, 0.2
    %v978 = vmul.f32 %v936, 0.2
    %v979 = vmul.f32 %v941, 0.2
    %v980 = vmul.f32 %v946, 0.2
    %v981 = vsel %vm949, %v871, %v965
    %v982 = vsel %vm950, %v876, %v966
    %v983 = vsel %vm951, %v881, %v967
    %v984 = vsel %vm952, %v886, %v968
    %v985 = vsel %vm953, %v891, %v969
    %v986 = vsel %vm954, %v896, %v970
    %v987 = vsel %vm955, %v901, %v971
    %v988 = vsel %vm956, %v906, %v972
    %v989 = vsel %vm957, %v911, %v973
    %v990 = vsel %vm958, %v916, %v974
    %v991 = vsel %vm959, %v921, %v975
    %v992 = vsel %vm960, %v926, %v976
    %v993 = vsel %vm961, %v931, %v977
    %v994 = vsel %vm962, %v936, %v978
    %v995 = vsel %vm963, %v941, %v979
    %v996 = vsel %vm964, %v946, %v980
    %v997 = vld [vmem:[%s5] sm:$0xff]
    %998 = vmatprep.subr.mxu0 0.0
    %999 = vmatpush1.msra.mxu0 %v981
    %1000 = vmatprep.subr.mxu0 0.0
    %1001 = vmatpush1.msra.mxu0 %v982
    %1002 = vmatprep.subr.mxu0 0.0
    %1003 = vmatpush1.msra.mxu0 %v983
    %1004 = vmatprep.subr.mxu0 0.0
    %1005 = vmatpush1.msra.mxu0 %v984
    %1006 = vmatprep.subr.mxu0 0.0
    %1007 = vmatpush1.msra.mxu0 %v985
    %1008 = vmatprep.subr.mxu0 0.0
    %1009 = vmatpush1.msra.mxu0 %v986
    %1010 = vmatprep.subr.mxu0 0.0
    %1011 = vmatpush1.msra.mxu0 %v987
    %1012 = vmatprep.subr.mxu0 0.0
    %1013 = vmatpush1.msra.mxu0 %v988
    %1014 = vmatprep.subr.mxu0 0.0
    %1015 = vmatpush1.msra.mxu0 %v989
    %1016 = vmatprep.subr.mxu0 0.0
    %1017 = vmatpush1.msra.mxu0 %v990
    %1018 = vmatprep.subr.mxu0 0.0
    %1019 = vmatpush1.msra.mxu0 %v991
    %1020 = vmatprep.subr.mxu0 0.0
    %1021 = vmatpush1.msra.mxu0 %v992
    %1022 = vmatprep.subr.mxu0 0.0
    %1023 = vmatpush1.msra.mxu0 %v993
    %1024 = vmatprep.subr.mxu0 0.0
    %1025 = vmatpush1.msra.mxu0 %v994
    %1026 = vmatprep.subr.mxu0 0.0
    %1027 = vmatpush1.msra.mxu0 %v995
    %1028 = vmatprep.subr.mxu0 0.0
    %1029 = vmatpush1.msra.mxu0 %v996
    %1030 = vmatprep.subr.mxu0 0.0
    %1031 = vmatpush1.msra.mxu0 0.0
    %1032 = vmatprep.subr.mxu0 0.0
    %1033 = vmatpush1.msra.mxu0 0.0
    %1034 = vmatprep.subr.mxu0 0.0
    %1035 = vmatpush1.msra.mxu0 0.0
    %1036 = vmatprep.subr.mxu0 0.0
    %1037 = vmatpush1.msra.mxu0 0.0
    %1038 = vmatprep.subr.mxu0 0.0
    %1039 = vmatpush1.msra.mxu0 0.0
    %1040 = vmatprep.subr.mxu0 0.0
    %1041 = vmatpush1.msra.mxu0 0.0
    %1042 = vmatprep.subr.mxu0 0.0
    %1043 = vmatpush1.msra.mxu0 0.0
    %1044 = vmatprep.subr.mxu0 0.0
    %1045 = vmatpush1.msra.mxu0 0.0
    %1046 = vmatprep.subr.mxu0 0.0
    %1047 = vmatpush1.msra.mxu0 0.0
    %1048 = vmatprep.subr.mxu0 0.0
    %1049 = vmatpush1.msra.mxu0 0.0
    %1050 = vmatprep.subr.mxu0 0.0
    %1051 = vmatpush1.msra.mxu0 0.0
    %1052 = vmatprep.subr.mxu0 0.0
    %1053 = vmatpush1.msra.mxu0 0.0
    %1054 = vmatprep.subr.mxu0 0.0
    %1055 = vmatpush1.msra.mxu0 0.0
    %1056 = vmatprep.subr.mxu0 0.0
    %1057 = vmatpush1.msra.mxu0 0.0
    %1058 = vmatprep.subr.mxu0 0.0
    %1059 = vmatpush1.msra.mxu0 0.0
    %1060 = vmatprep.subr.mxu0 0.0
    %1061 = vmatpush1.msra.mxu0 0.0
    %1062 = vmatprep.mubr.f32.mxu0 0.0
    %1063 = vmatmul.mubr.f32.gmra.mrb[0].mxu0 %v997
    %v1064 = vpop.f32.mrb[0].mxu0
    %v1065 = vadd.f32 0.0, %v1064
    %v1066 = vpop.f32.mrb[0].mxu0
    %1067 = vdwg.mxu0
    %v1068 = vld [vmem:[#allocation2] sm:$0x1]
    %1070 = vset.pattern.permute.xlu0 0
    %1071 = vperm.xlu0 %1070, %v1068
    %v1072 = vpop.permute.xlu0 %1071
    %v1074 = vlaneseq
    %v1075 = vshrl.u32 %v1074, 7
    %v1076 = vsub.s32 0, %v1075
    %v1077 = vrot.slane %v1072, %v1076
    %v1078 = vadd.f32 %v1065, %v1077
    %v1079 = vsub.f32 0.0, %v1078
    %v1080 = vmul.f32 %v1079, 1.442695
    %v1081 = vpow.pop %v1080
    %v1082 = vadd.f32 %v1081, 1.0
    %v1083 = vrcp.pop %v1082
    %1084 = vst [vmem:[#allocation3] sm:$0x1] %v1083
    // Predicated region
    $region30: #{tpu_custom_call.1} parent=1 // pred_check
      _
    $region31: #{tpu_custom_call.1} parent=1 // pred_check_branch
      %1086 = sbr.rel (0) target = $region33
    $region32: #{tpu_custom_call.1} parent=1 // pred_region
      %s1088 = ssub.s32 16, 16
      %1089 = vsyncadd [#allocation4], %s1088
      %s1091 = sshll.u32 [#allocation3], 4
      %s1092 = int_to_ptr.vmem [resolvable:$true] %s1091
      %1094 = dma.vmem_to_hbm [thread:$0]  %s1092, 16, %s7, [#allocation4]
    $region33: #{tpu_custom_call.1} parent=1 // pred_fallthru
      _
    // Predicated region
    $region34: #{tpu_custom_call.1} parent=1 // pred_check
      _
    $region35: #{tpu_custom_call.1} parent=1 // pred_check_branch
      %1096 = sbr.rel (0) target = $region37
    $region36: #{tpu_custom_call.1} parent=1 // pred_region
      %1097 = dma.done [#allocation4], 16
    $region37: #{tpu_custom_call.1} parent=1 // pred_fallthru
      _
    %1098 = vsyncpa [#allocation4], 1

</llo_original>
